<compile_context>
chip_gen: v5e
topology: v5e:2x2
jax: 0.10.0
libtpu: 0.0.40
codegen_flags: <defaults>
</compile_context>

<pallas_src>
import functools

import jax
import jax.numpy as jnp
from jax.experimental import pallas as pl
from jax.experimental.pallas import tpu as pltpu

GAMMA = 2.0
LANES = 128
SUBLANES = 8
MAX_ROW_TILE = 2048  # 2048 * 128 * 4B = 1 MiB per f32 input block


def _focal_bce_kernel(pt_ref, y_ref, out_ref, *, gamma):
    pt = pt_ref[...].astype(jnp.float32)
    y = y_ref[...].astype(jnp.float32)
    err = jnp.abs(pt - y)
    u = 1.0 - err

    # (1 - err)^gamma : avoid float pow (EUP log+exp) for non-negative integer gamma.
    if float(gamma) == float(int(gamma)) and gamma >= 0:
        g = int(gamma)
        w = jnp.ones_like(u)
        base = u
        while g:
            if g & 1:
                w = w * base
            base = base * base
            g >>= 1
    else:
        w = u ** jnp.float32(gamma)

    # Padded elements: err = 1 -> w = 0 and log(err) = 0 -> contribution exactly 0.
    loss = -w * jnp.log(err)

    # Per-tile partial sum, kept lane/sublane dense as a single (8, 128) output block.
    # reshape groups rows in chunks of 8, which matches the (8, 128) VMEM tiling, so
    # it is a free re-indexing followed by plain vector adds.
    rt = loss.shape[0]
    out_ref[...] = loss.reshape(rt // SUBLANES, SUBLANES, LANES).sum(axis=0)


@functools.partial(jax.jit, static_argnames=("gamma", "size_average"))
def focal_loss_bce(x, target, gamma=GAMMA, size_average=True):
    """x: NCHW array (values expected in (0,1)); target: same numel, soft targets."""
    if x.ndim > 2:
        n, c = x.shape[0], x.shape[1]
        # view(N, C, -1) -> transpose(1, 2) -> contiguous().view(-1) == NHWC flatten
        pt = jnp.transpose(x.reshape(n, c, -1), (0, 2, 1)).reshape(-1)
    else:
        pt = x.reshape(-1)
    y = target.reshape(-1)
    assert pt.shape[0] == y.shape[0], "input and target must have the same numel"

    n_elem = pt.shape[0]
    rows_needed = pl.cdiv(n_elem, LANES)
    # Pick the tile count first, then size tiles to the data: keeps blocks ~<=1 MiB
    # while limiting padding waste to < num_tiles * 8 rows.
    num_tiles = max(1, pl.cdiv(rows_needed, MAX_ROW_TILE))
    row_tile = pl.cdiv(pl.cdiv(rows_needed, num_tiles), SUBLANES) * SUBLANES
    rows = num_tiles * row_tile
    pad = rows * LANES - n_elem

    # Pad pt with 1.0 and y with 0.0: err = 1 -> loss contribution is exactly 0,
    # so no separate mask stream is needed.  Native dtype preserved on the wire.
    pt2 = jnp.pad(pt, (0, pad), constant_values=1.0).reshape(rows, LANES)
    y2 = jnp.pad(y, (0, pad), constant_values=0.0).reshape(rows, LANES)

    tile_spec = pl.BlockSpec((row_tile, LANES), lambda i: (i, 0))

    partials = pl.pallas_call(
        functools.partial(_focal_bce_kernel, gamma=gamma),
        out_shape=jax.ShapeDtypeStruct((num_tiles * SUBLANES, LANES), jnp.float32),
        grid_spec=pltpu.PrefetchScalarGridSpec(
            num_scalar_prefetch=0,
            grid=(num_tiles,),
            in_specs=[tile_spec, tile_spec],
            out_specs=pl.BlockSpec((SUBLANES, LANES), lambda i: (i, 0)),
        ),
        compiler_params=pltpu.CompilerParams(
            dimension_semantics=("parallel",)),
    )(pt2, y2)

    loss_sum = jnp.sum(partials)
    if size_average:
        return loss_sum / jnp.float32(n_elem)
    return loss_sum


def _reference(x, target, gamma=GAMMA, size_average=True):
    n, c = x.shape[0], x.shape[1]
    pt = jnp.transpose(x.reshape(n, c, -1), (0, 2, 1)).reshape(-1).astype(jnp.float32)
    y = target.reshape(-1).astype(jnp.float32)
    err = jnp.abs(pt - y)
    loss = -((1.0 - err) ** gamma) * jnp.log(err)
    return loss.mean() if size_average else loss.sum()


if __name__ == "__main__":
    key = jax.random.PRNGKey(0)
    k1, k2 = jax.random.split(key)
    # input: NCHW "probability-like" map (the module expects values in (0,1))
    x = jax.nn.sigmoid(jax.random.normal(k1, (2, 4, 16, 16), jnp.float32))
    # target: soft targets in (0,1), same numel (flattened row-major like torch .view(-1))
    target = jax.random.uniform(k2, (2, 4, 16, 16), jnp.float32,
                                minval=0.01, maxval=0.99)

    out = focal_loss_bce(x, target)
    out = jax.block_until_ready(out)

    ref = _reference(x, target)
    assert jnp.allclose(out, ref, rtol=1e-5, atol=1e-5), (out, ref)

    # Also exercise the sum-reduction path once (still the same kernel).
    out_sum = jax.block_until_ready(focal_loss_bce(x, target, size_average=False))
    ref_sum = _reference(x, target, size_average=False)
    assert jnp.allclose(out_sum, ref_sum, rtol=1e-5, atol=1e-4), (out_sum, ref_sum)

    # TODO(synk): discreteTarget=True path (scatter-based one-hot via idx_2_one_hot)
    # not ported; the module's forward also references an undefined `targetsFlag`
    # (upstream bug), so only the default soft-target path is implemented.
    print("KERNEL_OK")
</pallas_src>

<mosaic_0001>
module attributes {stable_mosaic.version = 11 : i64} {
  func.func @_focal_bce_kernel(%arg0: i32, %arg1: memref<16x128xf32, #tpu.memory_space<vmem>>, %arg2: memref<16x128xf32, #tpu.memory_space<vmem>>, %arg3: memref<8x128xf32, #tpu.memory_space<vmem>>) attributes {dimension_semantics = [#tpu.dimension_semantics<parallel>], iteration_bounds = array<i64: 1>, scalar_prefetch = 0 : i64, scratch_operands = 0 : i64, tpu.core_type = #tpu.core_type<tc>, window_params = [{transform_indices = @transform_0, window_bounds = array<i64: 16, 128>}, {transform_indices = @transform_1, window_bounds = array<i64: 16, 128>}, {transform_indices = @transform_2, window_bounds = array<i64: 8, 128>}]} {
    %c0 = arith.constant 0 : index
    %c0_0 = arith.constant 0 : index
    %0 = vector.load %arg1[%c0, %c0_0] : memref<16x128xf32, #tpu.memory_space<vmem>>, vector<16x128xf32>
    %c0_1 = arith.constant 0 : index
    %c0_2 = arith.constant 0 : index
    %1 = vector.load %arg2[%c0_1, %c0_2] : memref<16x128xf32, #tpu.memory_space<vmem>>, vector<16x128xf32>
    %2 = arith.subf %0, %1 : vector<16x128xf32>
    %3 = math.absf %2 : vector<16x128xf32>
    %cst = arith.constant 1.000000e+00 : f32
    %4 = vector.broadcast %cst : f32 to vector<16x128xf32>
    %5 = arith.subf %4, %3 : vector<16x128xf32>
    %cst_3 = arith.constant 1.000000e+00 : f32
    %6 = vector.broadcast %cst_3 : f32 to vector<16x128xf32>
    %7 = arith.mulf %5, %5 : vector<16x128xf32>
    %8 = arith.mulf %6, %7 : vector<16x128xf32>
    %cst_4 = arith.constant 0.000000e+00 : f32
    %9 = vector.broadcast %cst_4 : f32 to vector<16x128xf32>
    %10 = arith.subf %9, %8 : vector<16x128xf32>
    %11 = math.log %3 : vector<16x128xf32>
    %12 = arith.mulf %10, %11 : vector<16x128xf32>
    %13 = vector.shape_cast %12 : vector<16x128xf32> to vector<2x8x128xf32>
    %cst_5 = arith.constant dense<0.000000e+00> : vector<8x128xf32>
    %14 = vector.multi_reduction <add>, %13, %cst_5 [0] : vector<2x8x128xf32> to vector<8x128xf32>
    %c0_6 = arith.constant 0 : index
    %c0_7 = arith.constant 0 : index
    %15 = vector.load %arg3[%c0_6, %c0_7] : memref<8x128xf32, #tpu.memory_space<vmem>>, vector<8x128xf32>
    tpu.vector_store %arg3[%c0_6, %c0_7], %14 {strides = array<i32>} : memref<8x128xf32, #tpu.memory_space<vmem>>, vector<8x128xf32>,
    return
  }
  func.func @transform_0(%arg0: i32) -> (i32, i32) {
    %c0_i32 = arith.constant 0 : i32
    %c0_i32_0 = arith.constant 0 : i32
    return %arg0, %c0_i32 : i32, i32
  }
  func.func @transform_1(%arg0: i32) -> (i32, i32) {
    %c0_i32 = arith.constant 0 : i32
    %c0_i32_0 = arith.constant 0 : i32
    return %arg0, %c0_i32 : i32, i32
  }
  func.func @transform_2(%arg0: i32) -> (i32, i32) {
    %c0_i32 = arith.constant 0 : i32
    %c0_i32_0 = arith.constant 0 : i32
    return %arg0, %c0_i32 : i32, i32
  }
}

</mosaic_0001>

<llo_original>
// kernel: focal_loss_bce.1
$region0: #{focal_loss_bce.1}
  #allocation0 [shape = 'u32[]', space=smem, size = 0x4, offset = 0x4, fixed_abs, tag = 'smem constant byte address 0x4 - core index']
  #allocation1 [shape = 'u32[72,128]{1,0:T(1,128)}', space=vmem, size = 0x9000, scoped, tag = 'internal scratch']
  %s0 = inlined_call_operand.vmem [shape: f32[16,128], index: 0, kind: input, shape index: {}]
  %s1 = inlined_call_operand.vmem [shape: f32[16,128], index: 1, kind: input, shape index: {}]
  %s2 = inlined_call_operand.vmem [shape: f32[8,128], index: 2, kind: output, shape index: {}]
  %s3 = sld [smem:[#allocation0]]
  $region18: #{focal_loss_bce.1} parent=0
    _
  %s5 = ssub.s32 1, %s3
  %s6 = scalar_select 0, %s5, %s3
  // Predicated region
  $region2: #{focal_loss_bce.1} parent=0 // pred_check
    _
  $region3: #{focal_loss_bce.1} parent=0 // pred_check_branch
    %8 = sbr.rel (0) target = $region5
  $region4: #{focal_loss_bce.1} parent=0 // pred_region
    _
  $region5: #{focal_loss_bce.1} parent=0 // pred_fallthru
    _
  // Predicated region
  $region6: #{focal_loss_bce.1} parent=0 // pred_check
    _
  $region7: #{focal_loss_bce.1} parent=0 // pred_check_branch
    %10 = sbr.rel (0) target = $region9
  $region8: #{focal_loss_bce.1} parent=0 // pred_region
    _
  $region9: #{focal_loss_bce.1} parent=0 // pred_fallthru
    _
  %v11 = vld [vmem:[%s0] sm:$0xff]
  %v12 = vld [vmem:[%s0 + $0x8] sm:$0xff]
  %v13 = vld [vmem:[%s1] sm:$0xff]
  %v14 = vld [vmem:[%s1 + $0x8] sm:$0xff]
  %v15 = vsub.f32 %v11, %v13
  %v16 = vsub.f32 %v12, %v14
  %v17 = vand.u32 2147483647, %v15
  %v18 = vand.u32 2147483647, %v16
  %v19 = vsub.f32 1.0, %v17
  %v20 = vsub.f32 1.0, %v18
  %v21 = vmul.f32 %v19, %v19
  %v22 = vmul.f32 %v20, %v20
  %v23 = vsub.f32 0.0, %v21
  %v24 = vsub.f32 0.0, %v22
  %v25 = vlog2.pop %v17
  %v26 = vmul.f32 %v25, 0.6931472
  %v27 = vlog2.pop %v18
  %v28 = vmul.f32 %v27, 0.6931472
  %v29 = vmul.f32 %v23, %v26
  %v30 = vmul.f32 %v24, %v28
  %v31 = vadd.f32 %v29, %v30
  %32 = vst [vmem:[%s2] sm:$0xff] %v31
  // Predicated region
  $region10: #{focal_loss_bce.1} parent=0 // pred_check
    _
  $region11: #{focal_loss_bce.1} parent=0 // pred_check_branch
    %34 = sbr.rel (0) target = $region13
  $region12: #{focal_loss_bce.1} parent=0 // pred_region
    _
  $region13: #{focal_loss_bce.1} parent=0 // pred_fallthru
    _
  // Predicated region
  $region14: #{focal_loss_bce.1} parent=0 // pred_check
    _
  $region15: #{focal_loss_bce.1} parent=0 // pred_check_branch
    %36 = sbr.rel (0) target = $region17
  $region16: #{focal_loss_bce.1} parent=0 // pred_region
    _
  $region17: #{focal_loss_bce.1} parent=0 // pred_fallthru
    _

</llo_original>
